<compile_context>
chip_gen: v5e
topology: v5e:2x2
jax: 0.10.0
libtpu: 0.0.40
codegen_flags: <defaults>
</compile_context>

<pallas_src>
import jax
import jax.numpy as jnp
from jax.experimental import pallas as pl
from jax.experimental.pallas import tpu as pltpu

LANE = 128            # TPU lane width; fc2 output channels are padded to this
MAX_BATCH_TILE = 256  # batch tile size once B grows beyond a single block


def simplenet_kernel(x_ref, w1_ref, b1_ref, w2_ref, b2_ref, o_ref):
    # fc1: contract x dim-1 (In) with w1 dim-1 (In): (TB, In) x (H, In) -> (TB, H)
    x = x_ref[...].astype(w1_ref.dtype)                  # bf16 MXU operand
    h = jax.lax.dot_general(
        x, w1_ref[...],
        dimension_numbers=(((1,), (1,)), ((), ())),
        preferred_element_type=jnp.float32)
    h = jnp.maximum(h + b1_ref[...], 0.0)                # f32 bias + ReLU (v5e-safe)
    # fc2: contract h dim-1 (H) with w2 dim-1 (H): (TB, H) x (OutP, H) -> (TB, OutP)
    y = jax.lax.dot_general(
        h.astype(w2_ref.dtype), w2_ref[...],             # bf16 MXU operand, f32 acc
        dimension_numbers=(((1,), (1,)), ((), ())),
        preferred_element_type=jnp.float32)
    o_ref[...] = (y + b2_ref[...]).astype(o_ref.dtype)   # lane-dense (128-wide) store


def prepare_simplenet_params(w1, b1, w2, b2, mxu_dtype=jnp.bfloat16):
    """One-time (init-time) parameter prep; NOT on the per-call forward path.

    Keeps the PyTorch (out, in) layout (no transpose ever), casts the MXU
    operands to bf16, and zero-pads fc2's output channels to a multiple of
    128 so the kernel output is lane-dense.
    """
    hidden, _ = w1.shape
    out = w2.shape[0]
    out_p = ((out + LANE - 1) // LANE) * LANE

    w1_p = w1.astype(mxu_dtype)                                       # (H, In)
    w2_p = jnp.zeros((out_p, hidden), mxu_dtype).at[:out, :].set(
        w2.astype(mxu_dtype))                                         # (OutP, H)
    b1_r = b1.reshape(1, hidden).astype(jnp.float32)                  # (1, H)
    b2_r = jnp.zeros((1, out_p), jnp.float32).at[:, :out].set(
        b2.astype(jnp.float32))                                       # (1, OutP)
    return w1_p, b1_r, w2_p, b2_r, out


def simplenet_forward(x, w1_p, b1_r, w2_p, b2_r, out_features):
    """x: (B, In) f32. Prepared params from prepare_simplenet_params."""
    B, In = x.shape
    H = w1_p.shape[0]
    OutP = w2_p.shape[0]

    tb = B if B <= MAX_BATCH_TILE else MAX_BATCH_TILE
    grid = (pl.cdiv(B, tb),)

    out_padded = pl.pallas_call(
        simplenet_kernel,
        out_shape=jax.ShapeDtypeStruct((B, OutP), x.dtype),
        grid=grid,
        in_specs=[
            pl.BlockSpec((tb, In), lambda i: (i, 0)),     # x: batch-tiled
            pl.BlockSpec((H, In), lambda i: (0, 0)),      # w1: VMEM-resident
            pl.BlockSpec((1, H), lambda i: (0, 0)),       # b1: VMEM-resident
            pl.BlockSpec((OutP, H), lambda i: (0, 0)),    # w2: VMEM-resident
            pl.BlockSpec((1, OutP), lambda i: (0, 0)),    # b2: VMEM-resident
        ],
        out_specs=pl.BlockSpec((tb, OutP), lambda i: (i, 0)),
        compiler_params=pltpu.CompilerParams(
            dimension_semantics=("parallel",)),           # megacore sharding on v7x
    )(x, w1_p, b1_r, w2_p, b2_r)

    # Drop the zero-padded lanes back to the logical output width.
    return out_padded[:, :out_features]


def reference_forward(x, w1, b1, w2, b2):
    # f32 reference applying the same bf16 operand rounding the MXU sees.
    r = lambda a: a.astype(jnp.bfloat16).astype(jnp.float32)
    h = jnp.maximum(r(x) @ r(w1).T + b1, 0.0)
    return r(h) @ r(w2).T + b2


if __name__ == "__main__":
    # SimpleNet(input_size, hidden_size, output_size) at small shapes.
    batch, input_size, hidden_size, output_size = 8, 32, 64, 16

    key = jax.random.PRNGKey(0)
    kx, k1, k2, k3, k4 = jax.random.split(key, 5)

    x = jax.random.normal(kx, (batch, input_size), dtype=jnp.float32)

    # nn.Linear-style init: W (out, in), b (out,)
    bound1 = 1.0 / (input_size ** 0.5)
    w1 = jax.random.uniform(k1, (hidden_size, input_size), jnp.float32, -bound1, bound1)
    b1 = jax.random.uniform(k2, (hidden_size,), jnp.float32, -bound1, bound1)
    bound2 = 1.0 / (hidden_size ** 0.5)
    w2 = jax.random.uniform(k3, (output_size, hidden_size), jnp.float32, -bound2, bound2)
    b2 = jax.random.uniform(k4, (output_size,), jnp.float32, -bound2, bound2)

    # One-time parameter prep (init-time), then the lean forward path.
    w1_p, b1_r, w2_p, b2_r, out_f = prepare_simplenet_params(w1, b1, w2, b2)

    out = simplenet_forward(x, w1_p, b1_r, w2_p, b2_r, out_f)
    out = jax.block_until_ready(out)

    ref = reference_forward(x, w1, b1, w2, b2)
    assert out.shape == (batch, output_size)
    assert jnp.allclose(out, ref, atol=5e-3, rtol=5e-3), "mismatch vs JAX reference"

    print("KERNEL_OK")
</pallas_src>

<mosaic_0001>
module attributes {stable_mosaic.version = 11 : i64} {
  func.func @simplenet_kernel(%arg0: i32, %arg1: memref<8x32xf32, #tpu.memory_space<vmem>>, %arg2: memref<64x32xbf16, #tpu.memory_space<vmem>>, %arg3: memref<1x64xf32, #tpu.memory_space<vmem>>, %arg4: memref<128x64xbf16, #tpu.memory_space<vmem>>, %arg5: memref<1x128xf32, #tpu.memory_space<vmem>>, %arg6: memref<8x128xf32, #tpu.memory_space<vmem>>) attributes {dimension_semantics = [#tpu.dimension_semantics<parallel>], iteration_bounds = array<i64: 1>, scalar_prefetch = 0 : i64, scratch_operands = 0 : i64, tpu.core_type = #tpu.core_type<tc>, window_params = [{transform_indices = @transform_0, window_bounds = array<i64: 8, 32>}, {pipeline_mode = #tpu.pipeline_mode<synchronous>, transform_indices = @transform_1, window_bounds = array<i64: 64, 32>}, {pipeline_mode = #tpu.pipeline_mode<synchronous>, transform_indices = @transform_2, window_bounds = array<i64: 1, 64>}, {pipeline_mode = #tpu.pipeline_mode<synchronous>, transform_indices = @transform_3, window_bounds = array<i64: 128, 64>}, {pipeline_mode = #tpu.pipeline_mode<synchronous>, transform_indices = @transform_4, window_bounds = array<i64: 1, 128>}, {transform_indices = @transform_5, window_bounds = array<i64: 8, 128>}]} {
    %c0 = arith.constant 0 : index
    %c0_0 = arith.constant 0 : index
    %0 = vector.load %arg1[%c0, %c0_0] : memref<8x32xf32, #tpu.memory_space<vmem>>, vector<8x32xf32>
    %1 = arith.truncf %0 : vector<8x32xf32> to vector<8x32xbf16>
    %c0_1 = arith.constant 0 : index
    %c0_2 = arith.constant 0 : index
    %2 = vector.load %arg2[%c0_1, %c0_2] : memref<64x32xbf16, #tpu.memory_space<vmem>>, vector<64x32xbf16>
    %cst = arith.constant dense<0.000000e+00> : vector<8x64xf32>
    %3 = tpu.matmul %1, %2, %cst {dimension_numbers = #tpu.dot_dimension_numbers<[1], [1], [0], [0], [0, 0, 1, 0], [], []>} : vector<8x32xbf16>, vector<64x32xbf16>, vector<8x64xf32> -> vector<8x64xf32>
    %c0_3 = arith.constant 0 : index
    %c0_4 = arith.constant 0 : index
    %4 = vector.load %arg3[%c0_3, %c0_4] : memref<1x64xf32, #tpu.memory_space<vmem>>, vector<1x64xf32>
    %5 = vector.broadcast %4 : vector<1x64xf32> to vector<8x64xf32>
    %6 = arith.addf %3, %5 : vector<8x64xf32>
    %cst_5 = arith.constant 0.000000e+00 : f32
    %7 = vector.broadcast %cst_5 : f32 to vector<8x64xf32>
    %8 = arith.maximumf %6, %7 : vector<8x64xf32>
    %9 = arith.truncf %8 : vector<8x64xf32> to vector<8x64xbf16>
    %c0_6 = arith.constant 0 : index
    %c0_7 = arith.constant 0 : index
    %10 = vector.load %arg4[%c0_6, %c0_7] : memref<128x64xbf16, #tpu.memory_space<vmem>>, vector<128x64xbf16>
    %cst_8 = arith.constant dense<0.000000e+00> : vector<8x128xf32>
    %11 = tpu.matmul %9, %10, %cst_8 {dimension_numbers = #tpu.dot_dimension_numbers<[1], [1], [0], [0], [0, 0, 1, 0], [], []>} : vector<8x64xbf16>, vector<128x64xbf16>, vector<8x128xf32> -> vector<8x128xf32>
    %c0_9 = arith.constant 0 : index
    %c0_10 = arith.constant 0 : index
    %12 = vector.load %arg5[%c0_9, %c0_10] : memref<1x128xf32, #tpu.memory_space<vmem>>, vector<1x128xf32>
    %13 = vector.broadcast %12 : vector<1x128xf32> to vector<8x128xf32>
    %14 = arith.addf %11, %13 : vector<8x128xf32>
    %c0_11 = arith.constant 0 : index
    %c0_12 = arith.constant 0 : index
    %15 = vector.load %arg6[%c0_11, %c0_12] : memref<8x128xf32, #tpu.memory_space<vmem>>, vector<8x128xf32>
    tpu.vector_store %arg6[%c0_11, %c0_12], %14 {strides = array<i32>} : memref<8x128xf32, #tpu.memory_space<vmem>>, vector<8x128xf32>,
    return
  }
  func.func @transform_0(%arg0: i32) -> (i32, i32) {
    %c0_i32 = arith.constant 0 : i32
    %c0_i32_0 = arith.constant 0 : i32
    return %arg0, %c0_i32 : i32, i32
  }
  func.func @transform_1(%arg0: i32) -> (i32, i32) {
    %c0_i32 = arith.constant 0 : i32
    %c0_i32_0 = arith.constant 0 : i32
    %c0_i32_1 = arith.constant 0 : i32
    return %c0_i32, %c0_i32_0 : i32, i32
  }
  func.func @transform_2(%arg0: i32) -> (i32, i32) {
    %c0_i32 = arith.constant 0 : i32
    %c0_i32_0 = arith.constant 0 : i32
    %c0_i32_1 = arith.constant 0 : i32
    return %c0_i32, %c0_i32_0 : i32, i32
  }
  func.func @transform_3(%arg0: i32) -> (i32, i32) {
    %c0_i32 = arith.constant 0 : i32
    %c0_i32_0 = arith.constant 0 : i32
    %c0_i32_1 = arith.constant 0 : i32
    return %c0_i32, %c0_i32_0 : i32, i32
  }
  func.func @transform_4(%arg0: i32) -> (i32, i32) {
    %c0_i32 = arith.constant 0 : i32
    %c0_i32_0 = arith.constant 0 : i32
    %c0_i32_1 = arith.constant 0 : i32
    return %c0_i32, %c0_i32_0 : i32, i32
  }
  func.func @transform_5(%arg0: i32) -> (i32, i32) {
    %c0_i32 = arith.constant 0 : i32
    %c0_i32_0 = arith.constant 0 : i32
    return %arg0, %c0_i32 : i32, i32
  }
}

</mosaic_0001>

<llo_original>
// kernel: tpu_custom_call.1
$region0: #{tpu_custom_call.1}
  #allocation0 [shape = 'u32[]', space=smem, size = 0x4, offset = 0x4, fixed_abs, tag = 'smem constant byte address 0x4 - core index']
  #allocation1 [shape = 'u32[72,128]{1,0:T(1,128)}', space=vmem, size = 0x9000, scoped, tag = 'internal scratch']
  %s0 = inlined_call_operand.vmem [shape: f32[8,32], index: 0, kind: input, shape index: {}]
  %s1 = inlined_call_operand.vmem [shape: bf16[64,32], index: 1, kind: input, shape index: {}]
  %s2 = inlined_call_operand.vmem [shape: f32[1,64], index: 2, kind: input, shape index: {}]
  %s3 = inlined_call_operand.vmem [shape: bf16[128,64], index: 3, kind: input, shape index: {}]
  %s4 = inlined_call_operand.vmem [shape: f32[1,128], index: 4, kind: input, shape index: {}]
  %s5 = inlined_call_operand.hbm [shape: f32[8,128], index: 5, kind: output, shape index: {}]
  %s6 = sld [smem:[#allocation0]]
  $region30: #{tpu_custom_call.1} parent=0
    _
  %s8 = ssub.s32 1, %s6
  %s9 = scalar_select 0, %s8, %s6
  $region1: #{tpu_custom_call.1} parent=0
    #allocation2 [shape = 'u8[4096]{0}', space=vmem, size = 0x1000, scoped, tag = 'output window, operand 0, single buffered']
    #allocation3 [shape = 's32[1]{0}', space=sflag, size = 0x4, scoped, tag = 'scoped memory for tpu_custom_call.1']
    %10 = vsyncpa [#allocation3], 0
    // Predicated region
    $region2: #{tpu_custom_call.1} parent=1 // pred_check
      _
    $region3: #{tpu_custom_call.1} parent=1 // pred_check_branch
      %12 = sbr.rel (0) target = $region5
    $region4: #{tpu_custom_call.1} parent=1 // pred_region
      _
    $region5: #{tpu_custom_call.1} parent=1 // pred_fallthru
      _
    // Predicated region
    $region6: #{tpu_custom_call.1} parent=1 // pred_check
      _
    $region7: #{tpu_custom_call.1} parent=1 // pred_check_branch
      %14 = sbr.rel (0) target = $region9
    $region8: #{tpu_custom_call.1} parent=1 // pred_region
      _
    $region9: #{tpu_custom_call.1} parent=1 // pred_fallthru
      _
    // Predicated region
    $region10: #{tpu_custom_call.1} parent=1 // pred_check
      _
    $region11: #{tpu_custom_call.1} parent=1 // pred_check_branch
      %16 = sbr.rel (0) target = $region13
    $region12: #{tpu_custom_call.1} parent=1 // pred_region
      _
    $region13: #{tpu_custom_call.1} parent=1 // pred_fallthru
      _
    // Predicated region
    $region14: #{tpu_custom_call.1} parent=1 // pred_check
      _
    $region15: #{tpu_custom_call.1} parent=1 // pred_check_branch
      %18 = sbr.rel (0) target = $region17
    $region16: #{tpu_custom_call.1} parent=1 // pred_region
      _
    $region17: #{tpu_custom_call.1} parent=1 // pred_fallthru
      _
    // Predicated region
    $region18: #{tpu_custom_call.1} parent=1 // pred_check
      _
    $region19: #{tpu_custom_call.1} parent=1 // pred_check_branch
      %20 = sbr.rel (0) target = $region21
    $region20: #{tpu_custom_call.1} parent=1 // pred_region
      _
    $region21: #{tpu_custom_call.1} parent=1 // pred_fallthru
      _
    %v22 = vld [vmem:[%s0] sm:$0xff]
    %v23 = vpack.c.bf16 %v22, %v22
    %v24 = vld [vmem:[%s1] sm:$0xf]
    %v25 = vld [vmem:[%s1 + $0x4] sm:$0xf]
    %v26 = vld [vmem:[%s1 + $0x8] sm:$0xf]
    %v27 = vld [vmem:[%s1 + $0xc] sm:$0xf]
    %v28 = vld [vmem:[%s1 + $0x10] sm:$0xf]
    %v29 = vld [vmem:[%s1 + $0x14] sm:$0xf]
    %v30 = vld [vmem:[%s1 + $0x18] sm:$0xf]
    %v31 = vld [vmem:[%s1 + $0x1c] sm:$0xf]
    %v32 = vld [vmem:[%s2] sm:$0x1]
    %v34 = vperm.slane %v32, 0
    %v44 = vunpack.c.l.b16 %v24
    %v45 = vunpack.c.l.b16 %v25
    %v46 = vunpack.c.l.b16 %v26
    %v47 = vunpack.c.l.b16 %v27
    %v48 = vunpack.c.l.b16 %v28
    %v49 = vunpack.c.l.b16 %v29
    %v50 = vunpack.c.l.b16 %v30
    %v51 = vunpack.c.l.b16 %v31
    %v52 = vpack.c.b16 %v45, %v44
    %v53 = vpack.c.b16 %v47, %v46
    %v54 = vpack.c.b16 %v49, %v48
    %v55 = vpack.c.b16 %v51, %v50
    %vm56 = vcmask 261120
    %v58 = vsel %vm56, %v23, 0
    %v61 = vsel %vm56, %v52, 0
    %v64 = vsel %vm56, %v53, 0
    %v67 = vsel %vm56, %v54, 0
    %v70 = vsel %vm56, %v55, 0
    %72 = vmatpush.bf16.xpose.msra.mxu0 0
    %73 = vmatpush.bf16.xpose.msra.mxu0 0
    %74 = vmatpush.bf16.xpose.msra.mxu0 0
    %75 = vmatpush.bf16.xpose.msra.mxu0 0
    %76 = vmatpush.bf16.xpose.msra.mxu0 %v70
    %77 = vmatpush.bf16.xpose.msra.mxu0 %v67
    %78 = vmatpush.bf16.xpose.msra.mxu0 %v64
    %79 = vmatpush.bf16.xpose.msra.mxu0 %v61
    %80 = vmatmul.bf16.gmra.mxu0 %v58
    %v81 = vpop.f32.mrf.mxu0
    %v82 = vadd.f32 %v34, %v81
    %v83 = vpop.f32.mrf.mxu0
    %84 = vdwg.mxu0
    %v85 = vmax.f32 %v82, 0.0
    %v86 = vpack.c.bf16 %v85, %v85
    %v87 = vld [vmem:[%s3] sm:$0xf]
    %v88 = vld [vmem:[%s3 + $0x4] sm:$0xf]
    %v89 = vld [vmem:[%s3 + $0x8] sm:$0xf]
    %v90 = vld [vmem:[%s3 + $0xc] sm:$0xf]
    %v91 = vld [vmem:[%s3 + $0x10] sm:$0xf]
    %v92 = vld [vmem:[%s3 + $0x14] sm:$0xf]
    %v93 = vld [vmem:[%s3 + $0x18] sm:$0xf]
    %v94 = vld [vmem:[%s3 + $0x1c] sm:$0xf]
    %v95 = vld [vmem:[%s3 + $0x20] sm:$0xf]
    %v96 = vld [vmem:[%s3 + $0x24] sm:$0xf]
    %v97 = vld [vmem:[%s3 + $0x28] sm:$0xf]
    %v98 = vld [vmem:[%s3 + $0x2c] sm:$0xf]
    %v99 = vld [vmem:[%s3 + $0x30] sm:$0xf]
    %v100 = vld [vmem:[%s3 + $0x34] sm:$0xf]
    %v101 = vld [vmem:[%s3 + $0x38] sm:$0xf]
    %v102 = vld [vmem:[%s3 + $0x3c] sm:$0xf]
    %v103 = vld [vmem:[%s4] sm:$0x1]
    %v105 = vperm.slane %v103, 0
    %v123 = vunpack.c.l.b16 %v87
    %v124 = vunpack.c.l.b16 %v88
    %v125 = vunpack.c.l.b16 %v89
    %v126 = vunpack.c.l.b16 %v90
    %v127 = vunpack.c.l.b16 %v91
    %v128 = vunpack.c.l.b16 %v92
    %v129 = vunpack.c.l.b16 %v93
    %v130 = vunpack.c.l.b16 %v94
    %v131 = vunpack.c.l.b16 %v95
    %v132 = vunpack.c.l.b16 %v96
    %v133 = vunpack.c.l.b16 %v97
    %v134 = vunpack.c.l.b16 %v98
    %v135 = vunpack.c.l.b16 %v99
    %v136 = vunpack.c.l.b16 %v100
    %v137 = vunpack.c.l.b16 %v101
    %v138 = vunpack.c.l.b16 %v102
    %v139 = vpack.c.b16 %v124, %v123
    %v140 = vpack.c.b16 %v126, %v125
    %v141 = vpack.c.b16 %v128, %v127
    %v142 = vpack.c.b16 %v130, %v129
    %v143 = vpack.c.b16 %v132, %v131
    %v144 = vpack.c.b16 %v134, %v133
    %v145 = vpack.c.b16 %v136, %v135
    %v146 = vpack.c.b16 %v138, %v137
    %vm147 = vcmask 523264
    %v149 = vsel %vm147, %v86, 0
    %v152 = vsel %vm147, %v139, 0
    %v155 = vsel %vm147, %v140, 0
    %v158 = vsel %vm147, %v141, 0
    %v161 = vsel %vm147, %v142, 0
    %v164 = vsel %vm147, %v143, 0
    %v167 = vsel %vm147, %v144, 0
    %v170 = vsel %vm147, %v145, 0
    %v173 = vsel %vm147, %v146, 0
    %175 = vmatpush.bf16.xpose.msra.mxu0 %v173
    %176 = vmatpush.bf16.xpose.msra.mxu0 %v170
    %177 = vmatpush.bf16.xpose.msra.mxu0 %v167
    %178 = vmatpush.bf16.xpose.msra.mxu0 %v164
    %179 = vmatpush.bf16.xpose.msra.mxu0 %v161
    %180 = vmatpush.bf16.xpose.msra.mxu0 %v158
    %181 = vmatpush.bf16.xpose.msra.mxu0 %v155
    %182 = vmatpush.bf16.xpose.msra.mxu0 %v152
    %183 = vmatmul.bf16.gmra.mxu0 %v149
    %v184 = vpop.f32.mrf.mxu0
    %v185 = vadd.f32 %v105, %v184
    %v186 = vpop.f32.mrf.mxu0
    %187 = vdwg.mxu0
    %188 = vst [vmem:[#allocation2] sm:$0xff] %v185
    // Predicated region
    $region22: #{tpu_custom_call.1} parent=1 // pred_check
      _
    $region23: #{tpu_custom_call.1} parent=1 // pred_check_branch
      %190 = sbr.rel (0) target = $region25
    $region24: #{tpu_custom_call.1} parent=1 // pred_region
      %192 = vsyncadd [#allocation3], 0
      %s194 = sshll.u32 [#allocation2], 4
      %s195 = int_to_ptr.vmem [resolvable:$true] %s194
      %s196 = sshll.u32 %s5, 4
      %s197 = int_to_ptr.hbm [resolvable:$true] %s196
      %199 = dma.vmem_to_hbm [thread:$0]  %s195, 128, %s197, [#allocation3]
    $region25: #{tpu_custom_call.1} parent=1 // pred_fallthru
      _
    // Predicated region
    $region26: #{tpu_custom_call.1} parent=1 // pred_check
      _
    $region27: #{tpu_custom_call.1} parent=1 // pred_check_branch
      %201 = sbr.rel (0) target = $region29
    $region28: #{tpu_custom_call.1} parent=1 // pred_region
      %203 = dma.done [#allocation3], 128
    $region29: #{tpu_custom_call.1} parent=1 // pred_fallthru
      _
    %204 = vsyncpa [#allocation3], 1

</llo_original>
